<compile_context>
chip_gen: v6e
topology: v6e:2x2x1
jax: 0.10.0
libtpu: 0.0.40
codegen_flags: <defaults>
</compile_context>

<pallas_src>
import functools

import jax
import jax.numpy as jnp
from jax.experimental import pallas as pl
from jax.experimental.pallas import tpu as pltpu

_TILE = 512  # long-axis tile; sweep 512/1024/2048 if the profile shows exposed DMA


# -----------------------------------------------------------------------------
# Kernel A (NCHW path): one (C, t_hw) pixel tile of   out = w @ x + b
# -----------------------------------------------------------------------------
def _conv1x1_nchw_kernel(x_ref, w_ref, b_ref, o_ref):
    # x_ref: (C, t_hw) input dtype; w_ref: (n_out, C) compute dtype;
    # b_ref: (n_out, 1) f32; o_ref: (n_out, t_hw) f32.
    x = x_ref[...].astype(w_ref.dtype)  # VPU cast, no separate HBM cast pass
    acc = jnp.dot(w_ref[...], x, preferred_element_type=jnp.float32)
    o_ref[...] = (acc + b_ref[...]).astype(o_ref.dtype)


def _conv1x1_nchw(x3d, w, b_col, *, t_hw):
    """x3d: (B, C, HW), w: (n_out, C), b_col: (n_out, 1) -> (B, n_out, HW) f32."""
    B, C, HW = x3d.shape
    n_out = w.shape[0]
    return pl.pallas_call(
        _conv1x1_nchw_kernel,
        out_shape=jax.ShapeDtypeStruct((B, n_out, HW), jnp.float32),
        grid=(B, pl.cdiv(HW, t_hw)),
        in_specs=[
            pl.BlockSpec((None, C, t_hw), lambda b, j: (b, 0, j)),
            pl.BlockSpec((n_out, C), lambda b, j: (0, 0)),   # resident weight
            pl.BlockSpec((n_out, 1), lambda b, j: (0, 0)),   # resident bias
        ],
        out_specs=pl.BlockSpec((None, n_out, t_hw), lambda b, j: (b, 0, j)),
        compiler_params=pltpu.CompilerParams(
            dimension_semantics=("parallel", "parallel"),
        ),
    )(x3d, w, b_col)


# -----------------------------------------------------------------------------
# Kernel B (NHWC path): one (tm, C) row tile of   out = x @ w + b
# -----------------------------------------------------------------------------
def _conv1x1_rows_kernel(x_ref, w_ref, b_ref, o_ref):
    # x_ref: (tm, C) input dtype; w_ref: (C, n_out) compute dtype;
    # b_ref: (1, n_out) f32; o_ref: (tm, n_out) f32.
    x = x_ref[...].astype(w_ref.dtype)
    acc = jnp.dot(x, w_ref[...], preferred_element_type=jnp.float32)
    o_ref[...] = (acc + b_ref[...]).astype(o_ref.dtype)


def _conv1x1_rows(x2d, w, b_row, *, tm):
    """x2d: (M, C), w: (C, n_out), b_row: (1, n_out) -> (M, n_out) f32."""
    M, C = x2d.shape
    n_out = w.shape[1]
    return pl.pallas_call(
        _conv1x1_rows_kernel,
        out_shape=jax.ShapeDtypeStruct((M, n_out), jnp.float32),
        grid=(pl.cdiv(M, tm),),
        in_specs=[
            pl.BlockSpec((tm, C), lambda i: (i, 0)),
            pl.BlockSpec((C, n_out), lambda i: (0, 0)),      # resident weight
            pl.BlockSpec((1, n_out), lambda i: (0, 0)),      # resident bias
        ],
        out_specs=pl.BlockSpec((tm, n_out), lambda i: (i, 0)),
        compiler_params=pltpu.CompilerParams(
            dimension_semantics=("parallel",),
        ),
    )(x2d, w, b_row)


# -----------------------------------------------------------------------------
# Forward wrappers
# -----------------------------------------------------------------------------
@jax.jit
def _forward_nchw(x, w_nchw, b_col):
    B, C, H, W = x.shape
    HW = H * W
    x3d = x.reshape(B, C, HW)                      # free (contiguous) reshape
    t_hw = _TILE if HW >= _TILE else HW            # full-extent block if small
    out = _conv1x1_nchw(x3d, w_nchw, b_col, t_hw=t_hw)   # (B, n_out, HW) f32
    out = jnp.transpose(out, (0, 2, 1))            # small output-side permute
    return out.reshape(B, -1, 10)


@jax.jit
def _forward_nhwc(x, w_nhwc, b_row):
    B, H, W, C = x.shape
    M = B * H * W
    x2d = x.reshape(M, C)                          # free reshape; cast in-kernel
    tm = _TILE if M >= _TILE else M
    out = _conv1x1_rows(x2d, w_nhwc, b_row, tm=tm)  # (M, n_out) f32
    return out.reshape(B, -1, 10)


# -----------------------------------------------------------------------------
# Module
# -----------------------------------------------------------------------------
class LandmarkHead:
    """Pallas port of the PyTorch LandmarkHead (1x1 conv -> permute -> view)."""

    def __init__(self, inchannels=512, num_anchors=2, *,
                 compute_dtype=jnp.bfloat16, seed=0):
        self.C = inchannels
        self.A = num_anchors
        self.n_out = num_anchors * 10
        self.compute_dtype = compute_dtype

        # PyTorch Conv2d(inchannels, A*10, 1) init: U(-1/sqrt(fan_in), +).
        key = jax.random.PRNGKey(seed)
        kw, kb = jax.random.split(key)
        bound = 1.0 / (inchannels ** 0.5)
        # f32 master copies in PyTorch layout (out_ch, in_ch).
        self.w_oc = jax.random.uniform(
            kw, (self.n_out, self.C), jnp.float32, -bound, bound)
        self.b = jax.random.uniform(kb, (self.n_out,), jnp.float32, -bound, bound)

        # Kernel-side parameters (tiny; always resident in VMEM).
        self.w_nchw = self.w_oc.astype(compute_dtype)        # (n_out, C)
        self.w_nhwc = self.w_oc.T.astype(compute_dtype)      # (C, n_out)
        self.b_col = self.b.reshape(self.n_out, 1)           # f32
        self.b_row = self.b.reshape(1, self.n_out)           # f32

    def __call__(self, x, data_format="NCHW"):
        if data_format == "NCHW":
            assert x.shape[1] == self.C
            return _forward_nchw(x, self.w_nchw, self.b_col)
        elif data_format == "NHWC":
            assert x.shape[-1] == self.C
            return _forward_nhwc(x, self.w_nhwc, self.b_row)
        raise ValueError(f"unknown data_format: {data_format}")


# -----------------------------------------------------------------------------
# Pure-JAX reference (mirrors the PyTorch math in f32)
# -----------------------------------------------------------------------------
def _reference(x_nchw, w_oc, b, num_anchors):
    B, C, H, W = x_nchw.shape
    x2d = jnp.transpose(x_nchw, (0, 2, 3, 1)).reshape(B * H * W, C)
    out = x2d @ w_oc.T + b
    return out.reshape(B, H * W * num_anchors, 10)


if __name__ == "__main__":
    B, C, H, W, A = 2, 64, 16, 16, 2
    x = jax.random.normal(jax.random.PRNGKey(0), (B, C, H, W), jnp.float32)

    head = LandmarkHead(inchannels=C, num_anchors=A, seed=0)              # bf16
    head_f32 = LandmarkHead(inchannels=C, num_anchors=A,
                            compute_dtype=jnp.float32, seed=0)            # f32

    ref = _reference(x, head_f32.w_oc, head_f32.b, A)

    # Default bf16-operand head (f32 MXU accumulation).
    out = head(x)
    jax.block_until_ready(out)
    assert out.shape == (B, H * W * A, 10)
    assert jnp.allclose(out, ref, atol=5e-2, rtol=5e-2)

    # f32-operand head for a tight numerical check.
    out_f32 = head_f32(x)
    jax.block_until_ready(out_f32)
    assert jnp.allclose(out_f32, ref, atol=2e-3, rtol=2e-3)

    # NHWC path (no transpose anywhere): same numbers.
    x_nhwc = jnp.transpose(x, (0, 2, 3, 1))
    out_nhwc = head_f32(x_nhwc, data_format="NHWC")
    jax.block_until_ready(out_nhwc)
    assert jnp.allclose(out_nhwc, ref, atol=2e-3, rtol=2e-3)

    # Odd spatial size: exercises the block == full-extent (HW < tile) path.
    x2 = jax.random.normal(jax.random.PRNGKey(1), (1, C, 7, 5), jnp.float32)
    out2 = head_f32(x2)
    jax.block_until_ready(out2)
    assert out2.shape == (1, 7 * 5 * A, 10)
    assert jnp.allclose(out2, _reference(x2, head_f32.w_oc, head_f32.b, A),
                        atol=2e-3, rtol=2e-3)

    # Larger map: multi-tile grid with a masked partial last tile (800 = 512+288).
    x3 = jax.random.normal(jax.random.PRNGKey(2), (1, C, 40, 20), jnp.float32)
    out3 = head_f32(x3)
    jax.block_until_ready(out3)
    assert jnp.allclose(out3, _reference(x3, head_f32.w_oc, head_f32.b, A),
                        atol=2e-3, rtol=2e-3)

    print("KERNEL_OK")
</pallas_src>

<mosaic_0001>
module attributes {stable_mosaic.version = 11 : i64} {
  func.func @_conv1x1_nchw_kernel(%arg0: i32, %arg1: i32, %arg2: memref<1x64x256xf32, #tpu.memory_space<vmem>>, %arg3: memref<20x64xbf16, #tpu.memory_space<vmem>>, %arg4: memref<20x1xf32, #tpu.memory_space<vmem>>, %arg5: memref<1x20x256xf32, #tpu.memory_space<vmem>>) attributes {dimension_semantics = [#tpu.dimension_semantics<parallel>, #tpu.dimension_semantics<parallel>], iteration_bounds = array<i64: 2, 1>, scalar_prefetch = 0 : i64, scratch_operands = 0 : i64, tpu.core_type = #tpu.core_type<tc>, window_params = [{transform_indices = @transform_0, window_bounds = array<i64: 1, 64, 256>}, {pipeline_mode = #tpu.pipeline_mode<synchronous>, transform_indices = @transform_1, window_bounds = array<i64: 20, 64>}, {pipeline_mode = #tpu.pipeline_mode<synchronous>, transform_indices = @transform_2, window_bounds = array<i64: 20, 1>}, {transform_indices = @transform_3, window_bounds = array<i64: 1, 20, 256>}]} {
    %c0 = arith.constant 0 : index
    %c0_0 = arith.constant 0 : index
    %c0_1 = arith.constant 0 : index
    %0 = vector.load %arg2[%c0, %c0_0, %c0_1] : memref<1x64x256xf32, #tpu.memory_space<vmem>>, vector<1x64x256xf32>
    %1 = vector.shape_cast %0 : vector<1x64x256xf32> to vector<64x256xf32>
    %2 = arith.truncf %1 : vector<64x256xf32> to vector<64x256xbf16>
    %c0_2 = arith.constant 0 : index
    %c0_3 = arith.constant 0 : index
    %3 = vector.load %arg3[%c0_2, %c0_3] : memref<20x64xbf16, #tpu.memory_space<vmem>>, vector<20x64xbf16>
    %cst = arith.constant dense<0.000000e+00> : vector<20x256xf32>
    %4 = tpu.matmul %3, %2, %cst {dimension_numbers = #tpu.dot_dimension_numbers<[1], [0], [0], [1], [0, 0, 1, 1], [], []>} : vector<20x64xbf16>, vector<64x256xbf16>, vector<20x256xf32> -> vector<20x256xf32>
    %c0_4 = arith.constant 0 : index
    %c0_5 = arith.constant 0 : index
    %5 = vector.load %arg4[%c0_4, %c0_5] : memref<20x1xf32, #tpu.memory_space<vmem>>, vector<20x1xf32>
    %6 = vector.broadcast %5 : vector<20x1xf32> to vector<20x256xf32>
    %7 = arith.addf %4, %6 : vector<20x256xf32>
    %c0_6 = arith.constant 0 : index
    %c0_7 = arith.constant 0 : index
    %c0_8 = arith.constant 0 : index
    %8 = vector.load %arg5[%c0_6, %c0_7, %c0_8] : memref<1x20x256xf32, #tpu.memory_space<vmem>>, vector<1x20x256xf32>
    %9 = vector.shape_cast %8 : vector<1x20x256xf32> to vector<20x256xf32>
    %10 = vector.shape_cast %7 : vector<20x256xf32> to vector<1x20x256xf32>
    tpu.vector_store %arg5[%c0_6, %c0_7, %c0_8], %10 {strides = array<i32>} : memref<1x20x256xf32, #tpu.memory_space<vmem>>, vector<1x20x256xf32>,
    return
  }
  func.func @transform_0(%arg0: i32, %arg1: i32) -> (i32, i32, i32) {
    %c0_i32 = arith.constant 0 : i32
    %c0_i32_0 = arith.constant 0 : i32
    return %arg0, %c0_i32, %arg1 : i32, i32, i32
  }
  func.func @transform_1(%arg0: i32, %arg1: i32) -> (i32, i32) {
    %c0_i32 = arith.constant 0 : i32
    %c0_i32_0 = arith.constant 0 : i32
    %c0_i32_1 = arith.constant 0 : i32
    return %c0_i32, %c0_i32_0 : i32, i32
  }
  func.func @transform_2(%arg0: i32, %arg1: i32) -> (i32, i32) {
    %c0_i32 = arith.constant 0 : i32
    %c0_i32_0 = arith.constant 0 : i32
    %c0_i32_1 = arith.constant 0 : i32
    return %c0_i32, %c0_i32_0 : i32, i32
  }
  func.func @transform_3(%arg0: i32, %arg1: i32) -> (i32, i32, i32) {
    %c0_i32 = arith.constant 0 : i32
    %c0_i32_0 = arith.constant 0 : i32
    return %arg0, %c0_i32, %arg1 : i32, i32, i32
  }
}

</mosaic_0001>

<llo_original>
// kernel: _forward_nchw.1
$region0: #{_forward_nchw.1}
  #allocation0 [shape = 'u32[]', space=smem, size = 0x4, offset = 0x4, fixed_abs, tag = 'smem constant byte address 0x4 - core index']
  #allocation1 [shape = 'u32[144,128]{1,0:T(1,128)}', space=vmem, size = 0x12000, scoped, tag = 'internal scratch']
  %s0 = inlined_call_operand.vmem [shape: f32[2,64,256], index: 0, kind: input, shape index: {}]
  %s1 = inlined_call_operand.vmem [shape: bf16[20,64], index: 1, kind: input, shape index: {}]
  %s2 = inlined_call_operand.vmem [shape: f32[20,1], index: 2, kind: input, shape index: {}]
  %s3 = inlined_call_operand.vmem [shape: f32[2,20,256], index: 3, kind: output, shape index: {}]
  %s4 = sld [smem:[#allocation0]]
  $region45: #{_forward_nchw.1} parent=0
    _
  %s6 = ssub.s32 1, %s4
  %s7 = scalar_select 0, %s6, %s4
  loop: start=0, step=1, limit=4
  $region2: #{_forward_nchw.1} parent=0 // loop_pre_header
    _
  $region3: #{_forward_nchw.1} parent=0 // loop_header
    %s9 = sphi 0, %s13
    %p10 = scmp.ge.s32.totalorder %s9, 4
    %s16 = sphi 0, %s28
    %s17 = sphi 0, %s24
    %s18 = sphi 0, %s16
    %s19 = sphi 0, %s17
    %s20 = sphi 0, %s18
    %s21 = sphi 0, %s19
    %s33 = sphi 0, %s35
    %s36 = sphi 0, %s33
    %s37 = sphi 0, %s36
    %s53 = sphi 0, %s37
    %s57 = sphi 0, %s57
    %s59 = sphi 0, %s57
    %s60 = sphi 0, %s59
    %s74 = sphi 0, %s60
    %s78 = sphi 0, %s78
    %s80 = sphi 0, %s78
    %s81 = sphi 0, %s80
    %s95 = sphi 0, %s81
    %s103 = sphi 0, %s105
    %s106 = sphi 0, %s103
    %s107 = sphi 0, %s106
    %s123 = sphi 0, %s107
  $region4: #{_forward_nchw.1} parent=0 // loop_header_branch
    %12 = sbr.rel (%p10) target = $region8
  $region5: #{_forward_nchw.1} parent=0 // loop_body
    %s14 = ssub.s32 %s9, 1
    %s15 = ssub.s32 %s9, 2
    %s22 = sadd.s32 1, %s17
    %p23 = scmp.ge.s32.totalorder %s22, 1
    %s24 = scalar_select %p23, 0, %s22
    %s25 = sadd.s32 1, %s16
    %s26 = scalar_select %p23, %s25, %s16
    %p27 = scmp.ge.s32.totalorder %s26, 2
    %s28 = scalar_select %p27, 0, %s26
    %s29 = ssub.s32 %s16, %s28
    %s30 = ssub.s32 %s17, %s24
    %s31 = sor.u32 %s29, %s30
    %p32 = scmp.eq.s32.totalorder %s31, 0
    %s34 = sadd.s32 %s33, 1
    %s35 = scalar_select %p32, %s33, %s34
    %p38 = pneg %p32
    %p39 = scmp.eq.s32.totalorder %s9, 1
    %p40 = por %p38, %p39
    %p41 = scmp.ne.s32.totalorder %s33, %s36
    %p42 = scmp.eq.s32.totalorder %s9, 0
    %p43 = por %p41, %p42
    %p44 = scmp.ne.s32.totalorder %s33, %s36
    %p45 = scmp.eq.s32.totalorder %s14, 1
    %p46 = por %p44, %p45
    %p47 = scmp.ne.s32.totalorder %s36, %s37
    %p48 = scmp.eq.s32.totalorder %s14, 0
    %p49 = por %p47, %p48
    %p50 = scmp.ne.s32.totalorder %s36, %s37
    %p51 = scmp.eq.s32.totalorder %s15, 1
    %p52 = por %p50, %p51
    %p54 = scmp.ne.s32.totalorder %s37, %s53
    %p55 = scmp.eq.s32.totalorder %s15, 0
    %p56 = por %p54, %p55
    %s58 = sadd.s32 %s57, 1
    %p61 = scmp.eq.s32.totalorder %s9, 1
    %p62 = scmp.ne.s32.totalorder %s57, %s59
    %p63 = scmp.eq.s32.totalorder %s9, 0
    %p64 = por %p62, %p63
    %p65 = scmp.ne.s32.totalorder %s57, %s59
    %p66 = scmp.eq.s32.totalorder %s14, 1
    %p67 = por %p65, %p66
    %p68 = scmp.ne.s32.totalorder %s59, %s60
    %p69 = scmp.eq.s32.totalorder %s14, 0
    %p70 = por %p68, %p69
    %p71 = scmp.ne.s32.totalorder %s59, %s60
    %p72 = scmp.eq.s32.totalorder %s15, 1
    %p73 = por %p71, %p72
    %p75 = scmp.ne.s32.totalorder %s60, %s74
    %p76 = scmp.eq.s32.totalorder %s15, 0
    %p77 = por %p75, %p76
    %s79 = sadd.s32 %s78, 1
    %p82 = scmp.eq.s32.totalorder %s9, 1
    %p83 = scmp.ne.s32.totalorder %s78, %s80
    %p84 = scmp.eq.s32.totalorder %s9, 0
    %p85 = por %p83, %p84
    %p86 = scmp.ne.s32.totalorder %s78, %s80
    %p87 = scmp.eq.s32.totalorder %s14, 1
    %p88 = por %p86, %p87
    %p89 = scmp.ne.s32.totalorder %s80, %s81
    %p90 = scmp.eq.s32.totalorder %s14, 0
    %p91 = por %p89, %p90
    %p92 = scmp.ne.s32.totalorder %s80, %s81
    %p93 = scmp.eq.s32.totalorder %s15, 1
    %p94 = por %p92, %p93
    %p96 = scmp.ne.s32.totalorder %s81, %s95
    %p97 = scmp.eq.s32.totalorder %s15, 0
    %p98 = por %p96, %p97
    %s99 = ssub.s32 %s16, %s28
    %s100 = ssub.s32 %s17, %s24
    %s101 = sor.u32 %s99, %s100
    %p102 = scmp.eq.s32.totalorder %s101, 0
    %s104 = sadd.s32 %s103, 1
    %s105 = scalar_select %p102, %s103, %s104
    %p108 = pneg %p102
    %p109 = scmp.eq.s32.totalorder %s9, 1
    %p110 = por %p108, %p109
    %p111 = scmp.ne.s32.totalorder %s103, %s106
    %p112 = scmp.eq.s32.totalorder %s9, 0
    %p113 = por %p111, %p112
    %p114 = scmp.ne.s32.totalorder %s103, %s106
    %p115 = scmp.eq.s32.totalorder %s14, 1
    %p116 = por %p114, %p115
    %p117 = scmp.ne.s32.totalorder %s106, %s107
    %p118 = scmp.eq.s32.totalorder %s14, 0
    %p119 = por %p117, %p118
    %p120 = scmp.ne.s32.totalorder %s106, %s107
    %p121 = scmp.eq.s32.totalorder %s15, 1
    %p122 = por %p120, %p121
    %p124 = scmp.ne.s32.totalorder %s107, %s123
    %p125 = scmp.eq.s32.totalorder %s15, 0
    %p126 = por %p124, %p125
    %p127 = scmp.le.s32.totalorder 1, %s9
    %p128 = scmp.lt.s32.totalorder %s9, 3
    %p129 = pnand %p127, %p128
    %p130 = pneg %p129
    // Predicated region
    $region9: #{_forward_nchw.1} parent=5 // pred_check
      _
    $region10: #{_forward_nchw.1} parent=5 // pred_check_branch
      %132 = sbr.rel (%p129) target = $region12
    $region11: #{_forward_nchw.1} parent=5 // pred_region
      %s133 = ssub.s32 %s9, 1
      // Predicated region
      $region13: #{_forward_nchw.1} parent=11 // pred_check
        %p134 = pneg %p70
      $region14: #{_forward_nchw.1} parent=11 // pred_check_branch
        %136 = sbr.rel (%p134) target = $region16
      $region15: #{_forward_nchw.1} parent=11 // pred_region
        _
      $region16: #{_forward_nchw.1} parent=11 // pred_fallthru
        _
      // Predicated region
      $region17: #{_forward_nchw.1} parent=11 // pred_check
        %p137 = pneg %p91
      $region18: #{_forward_nchw.1} parent=11 // pred_check_branch
        %139 = sbr.rel (%p137) target = $region20
      $region19: #{_forward_nchw.1} parent=11 // pred_region
        _
      $region20: #{_forward_nchw.1} parent=11 // pred_fallthru
        _
    $region12: #{_forward_nchw.1} parent=5 // pred_fallthru
      _
    %p140 = scmp.lt.s32.totalorder %s9, 2
    // Predicated region
    $region21: #{_forward_nchw.1} parent=5 // pred_check
      %p141 = pneg %p140
    $region22: #{_forward_nchw.1} parent=5 // pred_check_branch
      %143 = sbr.rel (%p141) target = $region24
    $region23: #{_forward_nchw.1} parent=5 // pred_region
      // Predicated region
      $region25: #{_forward_nchw.1} parent=23 // pred_check
        %p144 = pneg %p43
      $region26: #{_forward_nchw.1} parent=23 // pred_check_branch
        %146 = sbr.rel (%p144) target = $region28
      $region27: #{_forward_nchw.1} parent=23 // pred_region
        %s147 = smul.u32 2, %s17
        %p148 = scmp.lt.s32.totalorder %s16, 1
        %s149 = scalar_select %p148, %s16, 1
        %p150 = scmp.lt.s32.totalorder %s147, 1
        %s151 = scalar_select %p150, %s147, 1
        %s152 = smul.addr %s149, 16
        %s153 = sadd.s32 %s151, %s152
        %s154 = smul.addr %s153, 8
        %s155 = scalar_lea.vmem %s0, %s154
        %s156 = smul.u32 2, %s17
      $region28: #{_forward_nchw.1} parent=23 // pred_fallthru
        _
    $region24: #{_forward_nchw.1} parent=5 // pred_fallthru
      _
    %p157 = scmp.le.s32.totalorder 1, %s9
    %p158 = scmp.lt.s32.totalorder %s9, 3
    %p159 = pnand %p157, %p158
    %p160 = pneg %p159
    // Predicated region
    $region29: #{_forward_nchw.1} parent=5 // pred_check
      _
    $region30: #{_forward_nchw.1} parent=5 // pred_check_branch
      %162 = sbr.rel (%p159) target = $region32
    $region31: #{_forward_nchw.1} parent=5 // pred_region
      %s163 = ssub.s32 %s9, 1
      %s164 = smul.u32 2, %s19
      %p165 = scmp.lt.s32.totalorder %s18, 1
      %s166 = scalar_select %p165, %s18, 1
      %p167 = scmp.lt.s32.totalorder %s164, 1
      %s168 = scalar_select %p167, %s164, 1
      %s169 = smul.addr %s166, 16
      %s170 = sadd.s32 %s168, %s169
      %s171 = smul.addr %s170, 8
      %s172 = scalar_lea.vmem %s0, %s171
      %p173 = pneg %p49
      %p174 = pneg %p46
      %p175 = pneg %p70
      %p176 = pneg %p67
      %p177 = pneg %p91
      %p178 = pneg %p88
      %p179 = pneg %p119
      %p180 = pneg %p116
      %s181 = smul.u32 2, %s19
      %p182 = scmp.lt.s32.totalorder %s18, 1
      %s183 = scalar_select %p182, %s18, 1
      %p184 = scmp.lt.s32.totalorder %s181, 1
      %s185 = scalar_select %p184, %s181, 1
      %s186 = smul.addr %s183, 6
      %s187 = sadd.s32 %s185, %s186
      %s188 = smul.addr %s187, 8
      %s189 = scalar_lea.vmem %s3, %s188
      %s190 = smul.u32 2, %s19
      %p191 = scmp.lt.s32.totalorder %s18, 1
      %s192 = scalar_select %p191, %s18, 1
      %p193 = scmp.lt.s32.totalorder %s190, 1
      %s194 = scalar_select %p193, %s190, 1
      %s195 = smul.addr %s192, 16
      %s196 = sadd.s32 %s194, %s195
      %s197 = smul.addr %s196, 8
      %s198 = scalar_lea.vmem %s0, %s197
      %s199 = smul.u32 2, %s19
      %s200 = smul.u32 2, %s19
      %p201 = scmp.lt.s32.totalorder %s18, 1
      %s202 = scalar_select %p201, %s18, 1
      %p203 = scmp.lt.s32.totalorder %s200, 1
      %s204 = scalar_select %p203, %s200, 1
      %s205 = smul.addr %s202, 6
      %s206 = sadd.s32 %s204, %s205
      %s207 = smul.addr %s206, 8
      %s208 = scalar_lea.vmem %s3, %s207
      %s209 = smul.u32 2, %s19
      %v211 = vld [vmem:[%s198] sm:$0xff]
      %v212 = vld [vmem:[%s198 + $0x8] sm:$0xff]
      %v213 = vld [vmem:[%s198 + $0x10] sm:$0xff]
      %v214 = vld [vmem:[%s198 + $0x18] sm:$0xff]
      %v215 = vld [vmem:[%s198 + $0x20] sm:$0xff]
      %v216 = vld [vmem:[%s198 + $0x28] sm:$0xff]
      %v217 = vld [vmem:[%s198 + $0x30] sm:$0xff]
      %v218 = vld [vmem:[%s198 + $0x38] sm:$0xff]
      %v219 = vld [vmem:[%s198 + $0x40] sm:$0xff]
      %v220 = vld [vmem:[%s198 + $0x48] sm:$0xff]
      %v221 = vld [vmem:[%s198 + $0x50] sm:$0xff]
      %v222 = vld [vmem:[%s198 + $0x58] sm:$0xff]
      %v223 = vld [vmem:[%s198 + $0x60] sm:$0xff]
      %v224 = vld [vmem:[%s198 + $0x68] sm:$0xff]
      %v225 = vld [vmem:[%s198 + $0x70] sm:$0xff]
      %v226 = vld [vmem:[%s198 + $0x78] sm:$0xff]
      %v227 = vpack.c.bf16 %v213, %v211
      %v228 = vpack.c.bf16 %v214, %v212
      %v229 = vpack.c.bf16 %v217, %v215
      %v230 = vpack.c.bf16 %v218, %v216
      %v231 = vpack.c.bf16 %v221, %v219
      %v232 = vpack.c.bf16 %v222, %v220
      %v233 = vpack.c.bf16 %v225, %v223
      %v234 = vpack.c.bf16 %v226, %v224
      %v235 = vld [vmem:[%s1] sm:$0xf]
      %v236 = vld [vmem:[%s1 + $0x4] sm:$0xf]
      %v237 = vld [vmem:[%s1 + $0x8] sm:$0x3]
      %v238 = vld [vmem:[%s2] sm:$0xff]
      %v239 = vld [vmem:[%s2 + $0x8] sm:$0xff]
      %v240 = vld [vmem:[%s2 + $0x10] sm:$0xf]
      %242 = vset.pattern.permute.xlu0 0
      %243 = vperm.xlu0 %242, %v238
      %v244 = vpop.permute.xlu0 %243
      %247 = vset.pattern.permute.xlu0 0
      %248 = vperm.xlu0 %247, %v239
      %v249 = vpop.permute.xlu0 %248
      %252 = vset.pattern.permute.xlu0 0
      %253 = vperm.xlu0 %252, %v240
      %v254 = vpop.permute.xlu0 %253
      %v259 = vunpack.c.l.b16 %v235
      %v260 = vunpack.c.l.b16 %v236
      %v261 = vunpack.c.l.b16 %v237
      %v262 = vpack.c.b16 %v260, %v259
      %v263 = vpack.c.b16 %v261, %v261
      %vm264 = vcmask 523264
      %v266 = vsel %vm264, %v262, 0
      %v269 = vsel %vm264, %v263, 0
      %271 = vmatprep.subr.bf16.mxu0 0
      %272 = vmatpush1.bf16.msra.mxu0 0
      %273 = vmatprep.subr.bf16.mxu0 0
      %274 = vmatpush1.bf16.msra.mxu0 0
      %275 = vmatprep.subr.bf16.mxu0 0
      %276 = vmatpush1.bf16.msra.mxu0 0
      %277 = vmatprep.subr.bf16.mxu0 0
      %278 = vmatpush1.bf16.msra.mxu0 0
      %279 = vmatprep.subr.bf16.mxu0 %v234
      %280 = vmatpush1.bf16.msra.mxu0 %v233
      %281 = vmatprep.subr.bf16.mxu0 %v232
      %282 = vmatpush1.bf16.msra.mxu0 %v231
      %283 = vmatprep.subr.bf16.mxu0 %v230
      %284 = vmatpush1.bf16.msra.mxu0 %v229
      %285 = vmatprep.subr.bf16.mxu0 %v228
      %286 = vmatpush1.bf16.msra.mxu0 %v227
      %287 = vmatprep.subr.bf16.mxu0 0
      %288 = vmatpush2.bf16.msra.mxu0 0
      %289 = vmatprep.subr.bf16.mxu0 0
      %290 = vmatpush2.bf16.msra.mxu0 0
      %291 = vmatprep.subr.bf16.mxu0 0
      %292 = vmatpush2.bf16.msra.mxu0 0
      %293 = vmatprep.subr.bf16.mxu0 0
      %294 = vmatpush2.bf16.msra.mxu0 0
      %295 = vmatprep.subr.bf16.mxu0 0
      %296 = vmatpush2.bf16.msra.mxu0 0
      %297 = vmatprep.subr.bf16.mxu0 0
      %298 = vmatpush2.bf16.msra.mxu0 0
      %299 = vmatprep.subr.bf16.mxu0 0
      %300 = vmatpush2.bf16.msra.mxu0 0
      %301 = vmatprep.subr.bf16.mxu0 0
      %302 = vmatpush2.bf16.msra.mxu0 0
      %303 = vmatprep.mubr.bf16.mxu0 0
      %304 = vmatmul.mubr.bf16.gmra.mxu0 %v266
      %v305 = vpop.f32.mrf.mxu0
      %v306 = vadd.f32 %v244, %v305
      %v307 = vpop.f32.mrf.mxu0
      %v308 = vadd.f32 %v244, %v307
      %v309 = vpop.f32.mrf.mxu0
      %v310 = vadd.f32 %v249, %v309
      %v311 = vpop.f32.mrf.mxu0
      %v312 = vadd.f32 %v249, %v311
      %313 = vmatprep.mubr.bf16.mxu0 0
      %314 = vmatmul.mubr.bf16.gmra.mxu0 %v269
      %v315 = vpop.f32.mrf.mxu0
      %v316 = vadd.f32 %v254, %v315
      %v317 = vpop.f32.mrf.mxu0
      %v318 = vadd.f32 %v254, %v317
      %v319 = vpop.f32.mrf.mxu0
      %v320 = vpop.f32.mrf.mxu0
      %321 = vdwg.mxu0
      %322 = vst [vmem:[%s208] sm:$0xff] %v306
      %323 = vst [vmem:[%s208 + $0x8] sm:$0xff] %v308
      %324 = vst [vmem:[%s208 + $0x10] sm:$0xff] %v310
      %325 = vst [vmem:[%s208 + $0x18] sm:$0xff] %v312
      %326 = vst [vmem:[%s208 + $0x20] sm:$0xf] %v316
      %327 = vst [vmem:[%s208 + $0x28] sm:$0xf] %v318
      %s328 = smul.u32 2, %s19
      %p329 = scmp.lt.s32.totalorder %s18, 1
      %s330 = scalar_select %p329, %s18, 1
      %p331 = scmp.lt.s32.totalorder %s328, 1
      %s332 = scalar_select %p331, %s328, 1
      %s333 = smul.addr %s330, 6
      %s334 = sadd.s32 %s332, %s333
      %s335 = smul.addr %s334, 8
      %s336 = scalar_lea.vmem %s3, %s335
      // Predicated region
      $region33: #{_forward_nchw.1} parent=31 // pred_check
        %p337 = pneg %p116
      $region34: #{_forward_nchw.1} parent=31 // pred_check_branch
        %339 = sbr.rel (%p337) target = $region36
      $region35: #{_forward_nchw.1} parent=31 // pred_region
        %s340 = smul.u32 2, %s19
      $region36: #{_forward_nchw.1} parent=31 // pred_fallthru
        _
    $region32: #{_forward_nchw.1} parent=5 // pred_fallthru
      _
    %p341 = scmp.le.s32.totalorder 2, %s9
    // Predicated region
    $region37: #{_forward_nchw.1} parent=5 // pred_check
      %p342 = pneg %p341
    $region38: #{_forward_nchw.1} parent=5 // pred_check_branch
      %344 = sbr.rel (%p342) target = $region40
    $region39: #{_forward_nchw.1} parent=5 // pred_region
      %s345 = ssub.s32 %s9, 2
      // Predicated region
      $region41: #{_forward_nchw.1} parent=39 // pred_check
        %p346 = pneg %p122
      $region42: #{_forward_nchw.1} parent=39 // pred_check_branch
        %348 = sbr.rel (%p346) target = $region44
      $region43: #{_forward_nchw.1} parent=39 // pred_region
        %s349 = smul.u32 2, %s21
        %p350 = scmp.lt.s32.totalorder %s20, 1
        %s351 = scalar_select %p350, %s20, 1
        %p352 = scmp.lt.s32.totalorder %s349, 1
        %s353 = scalar_select %p352, %s349, 1
        %s354 = smul.addr %s351, 6
        %s355 = sadd.s32 %s353, %s354
        %s356 = smul.addr %s355, 8
        %s357 = scalar_lea.vmem %s3, %s356
      $region44: #{_forward_nchw.1} parent=39 // pred_fallthru
        _
    $region40: #{_forward_nchw.1} parent=5 // pred_fallthru
      _
  $region6: #{_forward_nchw.1} parent=0 // loop_footer
    %s13 = sadd.s32 1, %s9
  $region7: #{_forward_nchw.1} parent=0 // loop_footer_branch
    %8 = sbr.rel target = $region3
  $region8: #{_forward_nchw.1} parent=0 // loop_exit
    _

</llo_original>
